<compile_context>
chip_gen: v5e
topology: v5e:2x2
jax: 0.10.0
libtpu: 0.0.40
codegen_flags: <defaults>
</compile_context>

<pallas_src>
import functools

import jax
import jax.numpy as jnp
from jax.experimental import pallas as pl
from jax.experimental.pallas import tpu as pltpu


def _odefunc_kernel(y_ref, w1_ref, w2_ref, w3_ref, b_ref, o_ref, *,
                    n_neurons, n_feat, off1, off2, off3):
    """Fused MLP forward for one batch tile, in feature-major (transposed) layout.

    y_ref: (n_feat, Bt)        w1: (n_neurons, n_feat)
    o_ref: (n_feat, Bt)        w2: (n_neurons, n_neurons)
                               w3: (n_feat, n_neurons)
    b_ref: packed column biases, sublane-aligned segments [b1; b2; b3], shape (rows, 1)
    """
    yt = y_ref[...]                                   # (n_feat, Bt), lane-dense
    b1 = b_ref[off1:off1 + n_neurons, :]              # (n_neurons, 1)
    b2 = b_ref[off2:off2 + n_neurons, :]              # (n_neurons, 1)
    b3 = b_ref[off3:off3 + n_feat, :]                 # (n_feat, 1)

    h1 = jnp.tanh(jnp.dot(w1_ref[...], yt, preferred_element_type=jnp.float32) + b1)
    h2 = jnp.tanh(jnp.dot(w2_ref[...], h1, preferred_element_type=jnp.float32) + b2)
    out = jnp.dot(w3_ref[...], h2, preferred_element_type=jnp.float32) + b3
    o_ref[...] = out.astype(o_ref.dtype)              # (n_feat, Bt) lane-dense store


def _round_up(x, m):
    return ((x + m - 1) // m) * m


def _choose_batch_tile(b_padded):
    """Largest lane tile (multiple of 128) that keeps >=2 grid steps (v7x dual-TC)."""
    for t in (2048, 1024, 512, 256, 128):
        if b_padded % t == 0 and b_padded // t >= 2:
            return t
    return b_padded  # batch fits in a single 128-wide tile -> grid = 1


def _pack_biases(b1, b2, b3):
    """Pack biases as column vectors into one VMEM buffer, 8-sublane aligned."""
    cols, offsets, row = [], [], 0
    for b in (b1, b2, b3):
        c = jnp.asarray(b).reshape(-1, 1)
        offsets.append(row)
        pad = (-c.shape[0]) % 8
        if pad:
            c = jnp.pad(c, ((0, pad), (0, 0)))
        cols.append(c)
        row += c.shape[0]
    return jnp.concatenate(cols, axis=0), tuple(offsets)


@functools.partial(jax.jit, static_argnames=("batch_tile",))
def odefunc_forward(t, y, params, batch_tile=None):
    """Pallas implementation of ODEFunc.forward(t, y).  `t` is unused (as in PyTorch).

    Params are in PyTorch nn.Linear layout: w (out_features, in_features), b (out_features,).
    """
    del t  # forward ignores t, matching the reference module
    w1, b1, w2, b2, w3, b3 = params
    B, n_feat = y.shape
    n_neurons = w1.shape[0]
    assert w1.shape == (n_neurons, n_feat)
    assert w2.shape == (n_neurons, n_neurons)
    assert w3.shape == (n_feat, n_neurons)

    # Pad the batch (lane) axis up to a multiple of 128 and pick a big lane tile.
    if batch_tile is None:
        b_padded = _round_up(B, 128)
        batch_tile = _choose_batch_tile(b_padded)
    else:
        assert batch_tile % 128 == 0, "batch_tile must be a multiple of 128 lanes"
        b_padded = _round_up(B, batch_tile)

    # Feature-major layout: batch on the lane axis -> lane-dense loads/stores.
    y_t = jnp.transpose(y)                              # (n_feat, B)
    if b_padded != B:
        y_t = jnp.pad(y_t, ((0, 0), (0, b_padded - B)))

    b_packed, (off1, off2, off3) = _pack_biases(b1, b2, b3)
    b_rows = b_packed.shape[0]

    grid = (b_padded // batch_tile,)
    rep = lambda i: (0, 0)  # weights/biases stay VMEM-resident across all grid steps

    kernel = functools.partial(
        _odefunc_kernel,
        n_neurons=n_neurons, n_feat=n_feat, off1=off1, off2=off2, off3=off3)

    out_t = pl.pallas_call(
        kernel,
        out_shape=jax.ShapeDtypeStruct((n_feat, b_padded), y.dtype),
        grid=grid,
        in_specs=[
            pl.BlockSpec((n_feat, batch_tile), lambda i: (0, i)),   # y^T tile (lane-dense)
            pl.BlockSpec((n_neurons, n_feat), rep),                 # W1
            pl.BlockSpec((n_neurons, n_neurons), rep),              # W2
            pl.BlockSpec((n_feat, n_neurons), rep),                 # W3
            pl.BlockSpec((b_rows, 1), rep),                         # packed biases
        ],
        out_specs=pl.BlockSpec((n_feat, batch_tile), lambda i: (0, i)),
        compiler_params=pltpu.CompilerParams(
            dimension_semantics=("parallel",),   # megacore: batch tiles split across TCs
        ),
    )(y_t, w1, w2, w3, b_packed)

    return jnp.transpose(out_t[:, :B])                  # back to (B, n_feat)


def init_odefunc_params(key, n_neurons, n_feat, dtype=jnp.float32):
    """Init matching the PyTorch module: weights ~ N(0, 0.1), biases = 0.

    PyTorch nn.Linear layout: weight (out_features, in_features), bias (out_features,).
    """
    k1, k2, k3 = jax.random.split(key, 3)
    w1 = 0.1 * jax.random.normal(k1, (n_neurons, n_feat), dtype)
    b1 = jnp.zeros((n_neurons,), dtype)
    w2 = 0.1 * jax.random.normal(k2, (n_neurons, n_neurons), dtype)
    b2 = jnp.zeros((n_neurons,), dtype)
    w3 = 0.1 * jax.random.normal(k3, (n_feat, n_neurons), dtype)
    b3 = jnp.zeros((n_feat,), dtype)
    return (w1, b1, w2, b2, w3, b3)


def _reference_forward(t, y, params):
    """Pure-JAX reference (same math as the PyTorch nn.Sequential)."""
    del t
    w1, b1, w2, b2, w3, b3 = params
    h = jnp.tanh(y @ w1.T + b1)
    h = jnp.tanh(h @ w2.T + b2)
    return h @ w3.T + b3


if __name__ == "__main__":
    key = jax.random.PRNGKey(0)
    k_params, k_y, k_b = jax.random.split(key, 3)

    N_feat = 8
    N_neurons = 32
    batch = 256  # -> padded batch 256, lane tile 128, grid=(2,) (both v7x cores busy)

    params = init_odefunc_params(k_params, N_neurons, N_feat)
    y = jax.random.normal(k_y, (batch, N_feat), jnp.float32)
    t = jnp.array(0.0, jnp.float32)  # unused, mirrors the PyTorch signature

    out = jax.block_until_ready(odefunc_forward(t, y, params))
    ref = _reference_forward(t, y, params)
    assert out.shape == (batch, N_feat)
    assert jnp.allclose(out, ref, atol=1e-4, rtol=1e-4)

    # Second check: non-zero biases + ragged batch (exercises bias broadcast and
    # the lane-axis padding path; padded batch 128, grid=(1,)).
    kb1, kb2, kb3 = jax.random.split(k_b, 3)
    w1, _, w2, _, w3, _ = params
    params_b = (
        w1, 0.1 * jax.random.normal(kb1, (N_neurons,), jnp.float32),
        w2, 0.1 * jax.random.normal(kb2, (N_neurons,), jnp.float32),
        w3, 0.1 * jax.random.normal(kb3, (N_feat,), jnp.float32),
    )
    y2 = jax.random.normal(k_y, (100, N_feat), jnp.float32)
    out2 = jax.block_until_ready(odefunc_forward(t, y2, params_b))
    ref2 = _reference_forward(t, y2, params_b)
    assert out2.shape == (100, N_feat)
    assert jnp.allclose(out2, ref2, atol=1e-4, rtol=1e-4)

    print("KERNEL_OK")
</pallas_src>

<mosaic_0001>
module attributes {stable_mosaic.version = 11 : i64} {
  func.func @_odefunc_kernel(%arg0: i32, %arg1: memref<8x128xf32, #tpu.memory_space<vmem>>, %arg2: memref<32x8xf32, #tpu.memory_space<vmem>>, %arg3: memref<32x32xf32, #tpu.memory_space<vmem>>, %arg4: memref<8x32xf32, #tpu.memory_space<vmem>>, %arg5: memref<72x1xf32, #tpu.memory_space<vmem>>, %arg6: memref<8x128xf32, #tpu.memory_space<vmem>>) attributes {dimension_semantics = [#tpu.dimension_semantics<parallel>], iteration_bounds = array<i64: 2>, scalar_prefetch = 0 : i64, scratch_operands = 0 : i64, tpu.core_type = #tpu.core_type<tc>, window_params = [{transform_indices = @transform_0, window_bounds = array<i64: 8, 128>}, {pipeline_mode = #tpu.pipeline_mode<synchronous>, transform_indices = @transform_1, window_bounds = array<i64: 32, 8>}, {pipeline_mode = #tpu.pipeline_mode<synchronous>, transform_indices = @transform_2, window_bounds = array<i64: 32, 32>}, {pipeline_mode = #tpu.pipeline_mode<synchronous>, transform_indices = @transform_3, window_bounds = array<i64: 8, 32>}, {pipeline_mode = #tpu.pipeline_mode<synchronous>, transform_indices = @transform_4, window_bounds = array<i64: 72, 1>}, {transform_indices = @transform_5, window_bounds = array<i64: 8, 128>}]} {
    %c0 = arith.constant 0 : index
    %c0_0 = arith.constant 0 : index
    %0 = vector.load %arg1[%c0, %c0_0] : memref<8x128xf32, #tpu.memory_space<vmem>>, vector<8x128xf32>
    %c0_1 = arith.constant 0 : index
    %c0_2 = arith.constant 0 : index
    %1 = vector.load %arg5[%c0_1, %c0_2] : memref<72x1xf32, #tpu.memory_space<vmem>>, vector<32x1xf32>
    %c32 = arith.constant 32 : index
    %c0_3 = arith.constant 0 : index
    %2 = vector.load %arg5[%c32, %c0_3] : memref<72x1xf32, #tpu.memory_space<vmem>>, vector<32x1xf32>
    %c64 = arith.constant 64 : index
    %c0_4 = arith.constant 0 : index
    %3 = vector.load %arg5[%c64, %c0_4] : memref<72x1xf32, #tpu.memory_space<vmem>>, vector<8x1xf32>
    %c0_5 = arith.constant 0 : index
    %c0_6 = arith.constant 0 : index
    %4 = vector.load %arg2[%c0_5, %c0_6] : memref<32x8xf32, #tpu.memory_space<vmem>>, vector<32x8xf32>
    %cst = arith.constant dense<0.000000e+00> : vector<32x128xf32>
    %5 = tpu.matmul %4, %0, %cst {dimension_numbers = #tpu.dot_dimension_numbers<[1], [0], [0], [1], [0, 0, 1, 1], [], []>} : vector<32x8xf32>, vector<8x128xf32>, vector<32x128xf32> -> vector<32x128xf32>
    %6 = vector.broadcast %1 : vector<32x1xf32> to vector<32x128xf32>
    %7 = arith.addf %5, %6 : vector<32x128xf32>
    %8 = math.tanh %7 : vector<32x128xf32>
    %c0_7 = arith.constant 0 : index
    %c0_8 = arith.constant 0 : index
    %9 = vector.load %arg3[%c0_7, %c0_8] : memref<32x32xf32, #tpu.memory_space<vmem>>, vector<32x32xf32>
    %cst_9 = arith.constant dense<0.000000e+00> : vector<32x128xf32>
    %10 = tpu.matmul %9, %8, %cst_9 {dimension_numbers = #tpu.dot_dimension_numbers<[1], [0], [0], [1], [0, 0, 1, 1], [], []>} : vector<32x32xf32>, vector<32x128xf32>, vector<32x128xf32> -> vector<32x128xf32>
    %11 = vector.broadcast %2 : vector<32x1xf32> to vector<32x128xf32>
    %12 = arith.addf %10, %11 : vector<32x128xf32>
    %13 = math.tanh %12 : vector<32x128xf32>
    %c0_10 = arith.constant 0 : index
    %c0_11 = arith.constant 0 : index
    %14 = vector.load %arg4[%c0_10, %c0_11] : memref<8x32xf32, #tpu.memory_space<vmem>>, vector<8x32xf32>
    %cst_12 = arith.constant dense<0.000000e+00> : vector<8x128xf32>
    %15 = tpu.matmul %14, %13, %cst_12 {dimension_numbers = #tpu.dot_dimension_numbers<[1], [0], [0], [1], [0, 0, 1, 1], [], []>} : vector<8x32xf32>, vector<32x128xf32>, vector<8x128xf32> -> vector<8x128xf32>
    %16 = vector.broadcast %3 : vector<8x1xf32> to vector<8x128xf32>
    %17 = arith.addf %15, %16 : vector<8x128xf32>
    %c0_13 = arith.constant 0 : index
    %c0_14 = arith.constant 0 : index
    %18 = vector.load %arg6[%c0_13, %c0_14] : memref<8x128xf32, #tpu.memory_space<vmem>>, vector<8x128xf32>
    tpu.vector_store %arg6[%c0_13, %c0_14], %17 {strides = array<i32>} : memref<8x128xf32, #tpu.memory_space<vmem>>, vector<8x128xf32>,
    return
  }
  func.func @transform_0(%arg0: i32) -> (i32, i32) {
    %c0_i32 = arith.constant 0 : i32
    %c0_i32_0 = arith.constant 0 : i32
    return %c0_i32, %arg0 : i32, i32
  }
  func.func @transform_1(%arg0: i32) -> (i32, i32) {
    %c0_i32 = arith.constant 0 : i32
    %c0_i32_0 = arith.constant 0 : i32
    %c0_i32_1 = arith.constant 0 : i32
    return %c0_i32, %c0_i32_0 : i32, i32
  }
  func.func @transform_2(%arg0: i32) -> (i32, i32) {
    %c0_i32 = arith.constant 0 : i32
    %c0_i32_0 = arith.constant 0 : i32
    %c0_i32_1 = arith.constant 0 : i32
    return %c0_i32, %c0_i32_0 : i32, i32
  }
  func.func @transform_3(%arg0: i32) -> (i32, i32) {
    %c0_i32 = arith.constant 0 : i32
    %c0_i32_0 = arith.constant 0 : i32
    %c0_i32_1 = arith.constant 0 : i32
    return %c0_i32, %c0_i32_0 : i32, i32
  }
  func.func @transform_4(%arg0: i32) -> (i32, i32) {
    %c0_i32 = arith.constant 0 : i32
    %c0_i32_0 = arith.constant 0 : i32
    %c0_i32_1 = arith.constant 0 : i32
    return %c0_i32, %c0_i32_0 : i32, i32
  }
  func.func @transform_5(%arg0: i32) -> (i32, i32) {
    %c0_i32 = arith.constant 0 : i32
    %c0_i32_0 = arith.constant 0 : i32
    return %c0_i32, %arg0 : i32, i32
  }
}

</mosaic_0001>

<llo_original>
// kernel: odefunc_forward.1
$region0: #{odefunc_forward.1}
  #allocation0 [shape = 'u32[]', space=smem, size = 0x4, offset = 0x4, fixed_abs, tag = 'smem constant byte address 0x4 - core index']
  #allocation1 [shape = 'u32[72,128]{1,0:T(1,128)}', space=vmem, size = 0x9000, scoped, tag = 'internal scratch']
  %s0 = inlined_call_operand.vmem [shape: f32[8,256], index: 0, kind: input, shape index: {}]
  %s1 = inlined_call_operand.vmem [shape: f32[32,8], index: 1, kind: input, shape index: {}]
  %s2 = inlined_call_operand.vmem [shape: f32[32,32], index: 2, kind: input, shape index: {}]
  %s3 = inlined_call_operand.vmem [shape: f32[8,32], index: 3, kind: input, shape index: {}]
  %s4 = inlined_call_operand.vmem [shape: f32[72,1], index: 4, kind: input, shape index: {}]
  %s5 = inlined_call_operand.hbm [shape: f32[8,256], index: 5, kind: output, shape index: {}]
  %s6 = sld [smem:[#allocation0]]
  $region53: #{odefunc_forward.1} parent=0
    _
  %s8 = ssub.s32 1, %s6
  %s9 = scalar_select 0, %s8, %s6
  $region1: #{odefunc_forward.1} parent=0
    #allocation2 [shape = 'u8[8192]{0}', space=vmem, size = 0x2000, scoped, tag = 'output window, operand 0']
    #allocation3 [shape = 's32[2]{0}', space=sflag, size = 0x8, scoped, tag = 'scoped memory for odefunc_forward.1']
    %10 = vsyncpa [#allocation3], 0
    %s11 = scalar_lea.sflag [#allocation3], 1
    %12 = vsyncpa %s11, 0
    loop: start=0, step=1, limit=4
    $region2: #{odefunc_forward.1} parent=1 // loop_pre_header
      _
    $region3: #{odefunc_forward.1} parent=1 // loop_header
      %s14 = sphi 0, %s18
      %p15 = scmp.ge.s32.totalorder %s14, 4
      %s24 = sphi 0, %s26
      %s27 = sphi 0, %s24
      %s28 = sphi 0, %s27
      %s44 = sphi 0, %s28
      %s48 = sphi 0, %s48
      %s50 = sphi 0, %s48
      %s51 = sphi 0, %s50
      %s65 = sphi 0, %s51
      %s69 = sphi 0, %s69
      %s71 = sphi 0, %s69
      %s72 = sphi 0, %s71
      %s86 = sphi 0, %s72
      %s90 = sphi 0, %s90
      %s92 = sphi 0, %s90
      %s93 = sphi 0, %s92
      %s107 = sphi 0, %s93
      %s111 = sphi 0, %s111
      %s113 = sphi 0, %s111
      %s114 = sphi 0, %s113
      %s128 = sphi 0, %s114
      %s134 = sphi 0, %s136
      %s137 = sphi 0, %s134
      %s138 = sphi 0, %s137
      %s154 = sphi 0, %s138
    $region4: #{odefunc_forward.1} parent=1 // loop_header_branch
      %17 = sbr.rel (%p15) target = $region8
    $region5: #{odefunc_forward.1} parent=1 // loop_body
      %s19 = ssub.s32 %s14, 1
      %s20 = ssub.s32 %s14, 2
      %s21 = sadd.s32 %s14, 1
      %s22 = ssub.s32 %s14, %s21
      %p23 = scmp.eq.s32.totalorder %s22, 0
      %s25 = sadd.s32 %s24, 1
      %s26 = scalar_select %p23, %s24, %s25
      %p29 = pneg %p23
      %p30 = scmp.eq.s32.totalorder %s14, 1
      %p31 = por %p29, %p30
      %p32 = scmp.ne.s32.totalorder %s24, %s27
      %p33 = scmp.eq.s32.totalorder %s14, 0
      %p34 = por %p32, %p33
      %p35 = scmp.ne.s32.totalorder %s24, %s27
      %p36 = scmp.eq.s32.totalorder %s19, 1
      %p37 = por %p35, %p36
      %p38 = scmp.ne.s32.totalorder %s27, %s28
      %p39 = scmp.eq.s32.totalorder %s19, 0
      %p40 = por %p38, %p39
      %p41 = scmp.ne.s32.totalorder %s27, %s28
      %p42 = scmp.eq.s32.totalorder %s20, 1
      %p43 = por %p41, %p42
      %p45 = scmp.ne.s32.totalorder %s28, %s44
      %p46 = scmp.eq.s32.totalorder %s20, 0
      %p47 = por %p45, %p46
      %s49 = sadd.s32 %s48, 1
      %p52 = scmp.eq.s32.totalorder %s14, 1
      %p53 = scmp.ne.s32.totalorder %s48, %s50
      %p54 = scmp.eq.s32.totalorder %s14, 0
      %p55 = por %p53, %p54
      %p56 = scmp.ne.s32.totalorder %s48, %s50
      %p57 = scmp.eq.s32.totalorder %s19, 1
      %p58 = por %p56, %p57
      %p59 = scmp.ne.s32.totalorder %s50, %s51
      %p60 = scmp.eq.s32.totalorder %s19, 0
      %p61 = por %p59, %p60
      %p62 = scmp.ne.s32.totalorder %s50, %s51
      %p63 = scmp.eq.s32.totalorder %s20, 1
      %p64 = por %p62, %p63
      %p66 = scmp.ne.s32.totalorder %s51, %s65
      %p67 = scmp.eq.s32.totalorder %s20, 0
      %p68 = por %p66, %p67
      %s70 = sadd.s32 %s69, 1
      %p73 = scmp.eq.s32.totalorder %s14, 1
      %p74 = scmp.ne.s32.totalorder %s69, %s71
      %p75 = scmp.eq.s32.totalorder %s14, 0
      %p76 = por %p74, %p75
      %p77 = scmp.ne.s32.totalorder %s69, %s71
      %p78 = scmp.eq.s32.totalorder %s19, 1
      %p79 = por %p77, %p78
      %p80 = scmp.ne.s32.totalorder %s71, %s72
      %p81 = scmp.eq.s32.totalorder %s19, 0
      %p82 = por %p80, %p81
      %p83 = scmp.ne.s32.totalorder %s71, %s72
      %p84 = scmp.eq.s32.totalorder %s20, 1
      %p85 = por %p83, %p84
      %p87 = scmp.ne.s32.totalorder %s72, %s86
      %p88 = scmp.eq.s32.totalorder %s20, 0
      %p89 = por %p87, %p88
      %s91 = sadd.s32 %s90, 1
      %p94 = scmp.eq.s32.totalorder %s14, 1
      %p95 = scmp.ne.s32.totalorder %s90, %s92
      %p96 = scmp.eq.s32.totalorder %s14, 0
      %p97 = por %p95, %p96
      %p98 = scmp.ne.s32.totalorder %s90, %s92
      %p99 = scmp.eq.s32.totalorder %s19, 1
      %p100 = por %p98, %p99
      %p101 = scmp.ne.s32.totalorder %s92, %s93
      %p102 = scmp.eq.s32.totalorder %s19, 0
      %p103 = por %p101, %p102
      %p104 = scmp.ne.s32.totalorder %s92, %s93
      %p105 = scmp.eq.s32.totalorder %s20, 1
      %p106 = por %p104, %p105
      %p108 = scmp.ne.s32.totalorder %s93, %s107
      %p109 = scmp.eq.s32.totalorder %s20, 0
      %p110 = por %p108, %p109
      %s112 = sadd.s32 %s111, 1
      %p115 = scmp.eq.s32.totalorder %s14, 1
      %p116 = scmp.ne.s32.totalorder %s111, %s113
      %p117 = scmp.eq.s32.totalorder %s14, 0
      %p118 = por %p116, %p117
      %p119 = scmp.ne.s32.totalorder %s111, %s113
      %p120 = scmp.eq.s32.totalorder %s19, 1
      %p121 = por %p119, %p120
      %p122 = scmp.ne.s32.totalorder %s113, %s114
      %p123 = scmp.eq.s32.totalorder %s19, 0
      %p124 = por %p122, %p123
      %p125 = scmp.ne.s32.totalorder %s113, %s114
      %p126 = scmp.eq.s32.totalorder %s20, 1
      %p127 = por %p125, %p126
      %p129 = scmp.ne.s32.totalorder %s114, %s128
      %p130 = scmp.eq.s32.totalorder %s20, 0
      %p131 = por %p129, %p130
      %s132 = ssub.s32 %s14, %s21
      %p133 = scmp.eq.s32.totalorder %s132, 0
      %s135 = sadd.s32 %s134, 1
      %s136 = scalar_select %p133, %s134, %s135
      %p139 = pneg %p133
      %p140 = scmp.eq.s32.totalorder %s14, 1
      %p141 = por %p139, %p140
      %p142 = scmp.ne.s32.totalorder %s134, %s137
      %p143 = scmp.eq.s32.totalorder %s14, 0
      %p144 = por %p142, %p143
      %p145 = scmp.ne.s32.totalorder %s134, %s137
      %p146 = scmp.eq.s32.totalorder %s19, 1
      %p147 = por %p145, %p146
      %p148 = scmp.ne.s32.totalorder %s137, %s138
      %p149 = scmp.eq.s32.totalorder %s19, 0
      %p150 = por %p148, %p149
      %p151 = scmp.ne.s32.totalorder %s137, %s138
      %p152 = scmp.eq.s32.totalorder %s20, 1
      %p153 = por %p151, %p152
      %p155 = scmp.ne.s32.totalorder %s138, %s154
      %p156 = scmp.eq.s32.totalorder %s20, 0
      %p157 = por %p155, %p156
      %p158 = scmp.le.s32.totalorder 1, %s14
      %p159 = scmp.lt.s32.totalorder %s14, 3
      %p160 = pnand %p158, %p159
      %p161 = pneg %p160
      // Predicated region
      $region9: #{odefunc_forward.1} parent=5 // pred_check
        _
      $region10: #{odefunc_forward.1} parent=5 // pred_check_branch
        %163 = sbr.rel (%p160) target = $region12
      $region11: #{odefunc_forward.1} parent=5 // pred_region
        %s164 = ssub.s32 %s14, 1
        // Predicated region
        $region13: #{odefunc_forward.1} parent=11 // pred_check
          %p165 = pneg %p61
        $region14: #{odefunc_forward.1} parent=11 // pred_check_branch
          %167 = sbr.rel (%p165) target = $region16
        $region15: #{odefunc_forward.1} parent=11 // pred_region
          _
        $region16: #{odefunc_forward.1} parent=11 // pred_fallthru
          _
        // Predicated region
        $region17: #{odefunc_forward.1} parent=11 // pred_check
          %p168 = pneg %p82
        $region18: #{odefunc_forward.1} parent=11 // pred_check_branch
          %170 = sbr.rel (%p168) target = $region20
        $region19: #{odefunc_forward.1} parent=11 // pred_region
          _
        $region20: #{odefunc_forward.1} parent=11 // pred_fallthru
          _
        // Predicated region
        $region21: #{odefunc_forward.1} parent=11 // pred_check
          %p171 = pneg %p103
        $region22: #{odefunc_forward.1} parent=11 // pred_check_branch
          %173 = sbr.rel (%p171) target = $region24
        $region23: #{odefunc_forward.1} parent=11 // pred_region
          _
        $region24: #{odefunc_forward.1} parent=11 // pred_fallthru
          _
        // Predicated region
        $region25: #{odefunc_forward.1} parent=11 // pred_check
          %p174 = pneg %p124
        $region26: #{odefunc_forward.1} parent=11 // pred_check_branch
          %176 = sbr.rel (%p174) target = $region28
        $region27: #{odefunc_forward.1} parent=11 // pred_region
          _
        $region28: #{odefunc_forward.1} parent=11 // pred_fallthru
          _
      $region12: #{odefunc_forward.1} parent=5 // pred_fallthru
        _
      %p177 = scmp.lt.s32.totalorder %s14, 2
      // Predicated region
      $region29: #{odefunc_forward.1} parent=5 // pred_check
        %p178 = pneg %p177
      $region30: #{odefunc_forward.1} parent=5 // pred_check_branch
        %180 = sbr.rel (%p178) target = $region32
      $region31: #{odefunc_forward.1} parent=5 // pred_region
        // Predicated region
        $region33: #{odefunc_forward.1} parent=31 // pred_check
          %p181 = pneg %p34
        $region34: #{odefunc_forward.1} parent=31 // pred_check_branch
          %183 = sbr.rel (%p181) target = $region36
        $region35: #{odefunc_forward.1} parent=31 // pred_region
          %p184 = scmp.lt.s32.totalorder %s14, 1
          %s185 = scalar_select %p184, %s14, 1
          %s186 = smul.addr %s185, 8
          %s187 = scalar_lea.vmem %s0, %s186
        $region36: #{odefunc_forward.1} parent=31 // pred_fallthru
          _
      $region32: #{odefunc_forward.1} parent=5 // pred_fallthru
        _
      %p188 = scmp.le.s32.totalorder 1, %s14
      %p189 = scmp.lt.s32.totalorder %s14, 3
      %p190 = pnand %p188, %p189
      %p191 = pneg %p190
      // Predicated region
      $region37: #{odefunc_forward.1} parent=5 // pred_check
        _
      $region38: #{odefunc_forward.1} parent=5 // pred_check_branch
        %193 = sbr.rel (%p190) target = $region40
      $region39: #{odefunc_forward.1} parent=5 // pred_region
        %s194 = ssub.s32 %s14, 1
        %p195 = scmp.lt.s32.totalorder %s19, 1
        %s196 = scalar_select %p195, %s19, 1
        %s197 = smul.addr %s196, 8
        %s198 = scalar_lea.vmem %s0, %s197
        %p199 = pneg %p40
        %p200 = pneg %p37
        %p201 = pneg %p61
        %p202 = pneg %p58
        %p203 = pneg %p82
        %p204 = pneg %p79
        %p205 = pneg %p103
        %p206 = pneg %p100
        %p207 = pneg %p124
        %p208 = pneg %p121
        %p209 = pneg %p150
        %p210 = pneg %p147
        %s211 = sand.u32 %s137, 1
        %s212 = scalar_lea.sflag [#allocation3], %s211
        %s213 = sand.u32 %s137, 1
        %s214 = smul.addr %s213, 8
        %s215 = scalar_lea.vmem [#allocation2], %s214
        %p216 = scmp.lt.s32.totalorder %s19, 1
        %s217 = scalar_select %p216, %s19, 1
        %s218 = smul.addr %s217, 8
        %s219 = scalar_lea.vmem %s0, %s218
        %v220 = vld [vmem:[%s219] sm:$0xff]
        %v221 = vld [vmem:[%s4] sm:$0xff]
        %v222 = vld [vmem:[%s4 + $0x8] sm:$0xff]
        %v223 = vld [vmem:[%s4 + $0x10] sm:$0xff]
        %v224 = vld [vmem:[%s4 + $0x18] sm:$0xff]
        %v225 = vld [vmem:[%s4 + $0x20] sm:$0xff]
        %v226 = vld [vmem:[%s4 + $0x28] sm:$0xff]
        %v227 = vld [vmem:[%s4 + $0x30] sm:$0xff]
        %v228 = vld [vmem:[%s4 + $0x38] sm:$0xff]
        %v229 = vld [vmem:[%s4 + $0x40] sm:$0xff]
        %v230 = vld [vmem:[%s1] sm:$0xff]
        %v231 = vld [vmem:[%s1 + $0x8] sm:$0xff]
        %v232 = vld [vmem:[%s1 + $0x10] sm:$0xff]
        %v233 = vld [vmem:[%s1 + $0x18] sm:$0xff]
        %235 = vset.pattern.permute.xlu0 0
        %236 = vperm.xlu0 %235, %v221
        %v237 = vpop.permute.xlu0 %236
        %240 = vset.pattern.permute.xlu0 0
        %241 = vperm.xlu0 %240, %v222
        %v242 = vpop.permute.xlu0 %241
        %245 = vset.pattern.permute.xlu0 0
        %246 = vperm.xlu0 %245, %v223
        %v247 = vpop.permute.xlu0 %246
        %250 = vset.pattern.permute.xlu0 0
        %251 = vperm.xlu0 %250, %v224
        %v252 = vpop.permute.xlu0 %251
        %vm254 = vcmask 64512
        %v256 = vsel %vm254, %v230, 0
        %v259 = vsel %vm254, %v231, 0
        %v262 = vsel %vm254, %v232, 0
        %v265 = vsel %vm254, %v233, 0
        %267 = vmatpush.msra.mxu0 0.0
        %268 = vmatpush.msra.mxu0 0.0
        %269 = vmatpush.msra.mxu0 0.0
        %270 = vmatpush.msra.mxu0 0.0
        %271 = vmatpush.msra.mxu0 0.0
        %272 = vmatpush.msra.mxu0 0.0
        %273 = vmatpush.msra.mxu0 0.0
        %274 = vmatpush.msra.mxu0 0.0
        %275 = vmatpush.msra.mxu0 0.0
        %276 = vmatpush.msra.mxu0 0.0
        %277 = vmatpush.msra.mxu0 0.0
        %278 = vmatpush.msra.mxu0 0.0
        %279 = vmatpush.msra.mxu0 0.0
        %280 = vmatpush.msra.mxu0 0.0
        %281 = vmatpush.msra.mxu0 0.0
        %282 = vmatpush.msra.mxu0 %v220
        %283 = vmatmul.f32.gmra.mxu0 %v256
        %v284 = vpop.f32.mrf.mxu0
        %v285 = vadd.f32 %v237, %v284
        %286 = vmatmul.f32.gmra.mxu0 %v259
        %v287 = vpop.f32.mrf.mxu0
        %v288 = vadd.f32 %v242, %v287
        %289 = vmatmul.f32.gmra.mxu0 %v262
        %v290 = vpop.f32.mrf.mxu0
        %v291 = vadd.f32 %v247, %v290
        %292 = vmatmul.f32.gmra.mxu0 %v265
        %v293 = vpop.f32.mrf.mxu0
        %v294 = vadd.f32 %v252, %v293
        %295 = vdwg.mxu0
        %v296 = vtanh.pop %v285
        %v297 = vtanh.pop %v288
        %v298 = vtanh.pop %v291
        %v299 = vtanh.pop %v294
        %v300 = vld [vmem:[%s2] sm:$0xff]
        %v301 = vld [vmem:[%s2 + $0x8] sm:$0xff]
        %v302 = vld [vmem:[%s2 + $0x10] sm:$0xff]
        %v303 = vld [vmem:[%s2 + $0x18] sm:$0xff]
        %305 = vset.pattern.permute.xlu0 0
        %306 = vperm.xlu0 %305, %v225
        %v307 = vpop.permute.xlu0 %306
        %310 = vset.pattern.permute.xlu0 0
        %311 = vperm.xlu0 %310, %v226
        %v312 = vpop.permute.xlu0 %311
        %315 = vset.pattern.permute.xlu0 0
        %316 = vperm.xlu0 %315, %v227
        %v317 = vpop.permute.xlu0 %316
        %320 = vset.pattern.permute.xlu0 0
        %321 = vperm.xlu0 %320, %v228
        %v322 = vpop.permute.xlu0 %321
        %vm324 = vcmask 261120
        %v326 = vsel %vm324, %v300, 0
        %v329 = vsel %vm324, %v301, 0
        %v332 = vsel %vm324, %v302, 0
        %v335 = vsel %vm324, %v303, 0
        %337 = vmatpush.msra.mxu0 0.0
        %338 = vmatpush.msra.mxu0 0.0
        %339 = vmatpush.msra.mxu0 0.0
        %340 = vmatpush.msra.mxu0 0.0
        %341 = vmatpush.msra.mxu0 0.0
        %342 = vmatpush.msra.mxu0 0.0
        %343 = vmatpush.msra.mxu0 0.0
        %344 = vmatpush.msra.mxu0 0.0
        %345 = vmatpush.msra.mxu0 0.0
        %346 = vmatpush.msra.mxu0 0.0
        %347 = vmatpush.msra.mxu0 0.0
        %348 = vmatpush.msra.mxu0 0.0
        %349 = vmatpush.msra.mxu0 %v299
        %350 = vmatpush.msra.mxu0 %v298
        %351 = vmatpush.msra.mxu0 %v297
        %352 = vmatpush.msra.mxu0 %v296
        %353 = vmatmul.f32.gmra.mxu0 %v326
        %v354 = vpop.f32.mrf.mxu0
        %v355 = vadd.f32 %v307, %v354
        %356 = vmatmul.f32.gmra.mxu0 %v329
        %v357 = vpop.f32.mrf.mxu0
        %v358 = vadd.f32 %v312, %v357
        %359 = vmatmul.f32.gmra.mxu0 %v332
        %v360 = vpop.f32.mrf.mxu0
        %v361 = vadd.f32 %v317, %v360
        %362 = vmatmul.f32.gmra.mxu0 %v335
        %v363 = vpop.f32.mrf.mxu0
        %v364 = vadd.f32 %v322, %v363
        %365 = vdwg.mxu0
        %v366 = vtanh.pop %v355
        %v367 = vtanh.pop %v358
        %v368 = vtanh.pop %v361
        %v369 = vtanh.pop %v364
        %v370 = vld [vmem:[%s3] sm:$0xff]
        %372 = vset.pattern.permute.xlu0 0
        %373 = vperm.xlu0 %372, %v229
        %v374 = vpop.permute.xlu0 %373
        %v377 = vsel %vm324, %v370, 0
        %379 = vmatpush.msra.mxu0 0.0
        %380 = vmatpush.msra.mxu0 0.0
        %381 = vmatpush.msra.mxu0 0.0
        %382 = vmatpush.msra.mxu0 0.0
        %383 = vmatpush.msra.mxu0 0.0
        %384 = vmatpush.msra.mxu0 0.0
        %385 = vmatpush.msra.mxu0 0.0
        %386 = vmatpush.msra.mxu0 0.0
        %387 = vmatpush.msra.mxu0 0.0
        %388 = vmatpush.msra.mxu0 0.0
        %389 = vmatpush.msra.mxu0 0.0
        %390 = vmatpush.msra.mxu0 0.0
        %391 = vmatpush.msra.mxu0 %v369
        %392 = vmatpush.msra.mxu0 %v368
        %393 = vmatpush.msra.mxu0 %v367
        %394 = vmatpush.msra.mxu0 %v366
        %395 = vmatmul.f32.gmra.mxu0 %v377
        %v396 = vpop.f32.mrf.mxu0
        %v397 = vadd.f32 %v374, %v396
        %398 = vdwg.mxu0
        %399 = vst [vmem:[%s215] sm:$0xff] %v397
        %s400 = sand.u32 %s137, 1
        %s401 = scalar_lea.sflag [#allocation3], %s400
        %s402 = sand.u32 %s137, 1
        %s403 = smul.addr %s402, 8
        %s404 = scalar_lea.vmem [#allocation2], %s403
        // Predicated region
        $region41: #{odefunc_forward.1} parent=39 // pred_check
          %p405 = pneg %p147
        $region42: #{odefunc_forward.1} parent=39 // pred_check_branch
          %407 = sbr.rel (%p405) target = $region44
        $region43: #{odefunc_forward.1} parent=39 // pred_region
          %409 = vsyncadd %s401, 0
          %s410 = smul.addr %s19, 8
          %s411 = scalar_lea.hbm %s5, %s410
          %s413 = sshll.u32 %s404, 4
          %s414 = int_to_ptr.vmem [resolvable:$true] %s413
          %s415 = sshll.u32 %s411, 4
          %s416 = int_to_ptr.hbm [resolvable:$true] %s415
          %418 = dma.vmem_to_hbm [thread:$0]  %s414, 128, %s416, %s401
        $region44: #{odefunc_forward.1} parent=39 // pred_fallthru
          _
      $region40: #{odefunc_forward.1} parent=5 // pred_fallthru
        _
      %p419 = scmp.le.s32.totalorder 2, %s14
      // Predicated region
      $region45: #{odefunc_forward.1} parent=5 // pred_check
        %p420 = pneg %p419
      $region46: #{odefunc_forward.1} parent=5 // pred_check_branch
        %422 = sbr.rel (%p420) target = $region48
      $region47: #{odefunc_forward.1} parent=5 // pred_region
        %s423 = ssub.s32 %s14, 2
        // Predicated region
        $region49: #{odefunc_forward.1} parent=47 // pred_check
          %p424 = pneg %p153
        $region50: #{odefunc_forward.1} parent=47 // pred_check_branch
          %426 = sbr.rel (%p424) target = $region52
        $region51: #{odefunc_forward.1} parent=47 // pred_region
          %s427 = sand.u32 %s138, 1
          %s428 = scalar_lea.sflag [#allocation3], %s427
          %s429 = sand.u32 %s138, 1
          %s430 = smul.addr %s429, 8
          %s431 = scalar_lea.vmem [#allocation2], %s430
          %433 = dma.done %s428, 128
        $region52: #{odefunc_forward.1} parent=47 // pred_fallthru
          _
      $region48: #{odefunc_forward.1} parent=5 // pred_fallthru
        _
    $region6: #{odefunc_forward.1} parent=1 // loop_footer
      %s18 = sadd.s32 1, %s14
    $region7: #{odefunc_forward.1} parent=1 // loop_footer_branch
      %13 = sbr.rel target = $region3
    $region8: #{odefunc_forward.1} parent=1 // loop_exit
      _
    %434 = vsyncpa [#allocation3], 1
    %s435 = scalar_lea.sflag [#allocation3], 1
    %436 = vsyncpa %s435, 1

</llo_original>
